<compile_context>
chip_gen: v7x
topology: tpu7x:2x2x1
jax: 0.10.0
libtpu: 0.0.40
codegen_flags: <defaults>
</compile_context>

<pallas_src>
import functools

import jax
import jax.numpy as jnp
from jax.experimental import pallas as pl
from jax.experimental.pallas import tpu as pltpu

MAXH = 25      # hidden channels (nn.Conv2d(3, maxh, 1, bias=False))
DEPTH = 6      # number of hidden 1x1 conv + tanh blocks
C_IN = 3
C_OUT = 3


def simplenet_kernel(x_ref, w_in_ref, w_hid_ref, w_out_ref, o_ref):
    # x_ref:     (C_IN, TM)          pixels on the lane axis
    # w_in_ref:  (MAXH, C_IN)        PyTorch (out, in) conv weight layout
    # w_hid_ref: (DEPTH, MAXH, MAXH)
    # w_out_ref: (C_OUT, MAXH)
    # o_ref:     (C_OUT, TM)
    x = x_ref[...]
    w_in = w_in_ref[...]

    # Input 1x1 conv (K = 3): three VPU broadcast-FMAs (static unroll).
    h = w_in[:, 0:1] * x[0:1, :]
    for c in range(1, C_IN):
        h = h + w_in[:, c:c + 1] * x[c:c + 1, :]
    h = jnp.tanh(h)

    # Hidden 25x25 layers on the MXU; tanh goes to the EUP (static unroll,
    # DEPTH is a compile-time constant).
    for d in range(DEPTH):
        h = jnp.tanh(
            jnp.dot(w_hid_ref[d], h, preferred_element_type=jnp.float32)
        )

    # Output 1x1 conv (3 output channels): one small MXU pass. The store's last
    # dim is TM (lane-dense) -> unmasked vst.
    logits = jnp.dot(w_out_ref[...], h, preferred_element_type=jnp.float32)
    o_ref[...] = jax.nn.sigmoid(logits).astype(o_ref.dtype)


def _pick_tile(hw, max_tile=8192):
    """Largest pixel tile that (a) divides H*W, (b) keeps the lane axis dense
    (multiple of 128 or the full extent), and (c) stays <= max_tile. Bigger
    tiles amortize the ~0.35us per-grid-step overhead; even at TM=8192 the
    per-tile VMEM footprint is tiny (x/out tiles ~96 KiB each, hidden
    intermediates ~1 MiB), far below the scoped-VMEM default."""
    if hw <= max_tile:
        return hw
    start = max_tile - (max_tile % 128)
    for t in range(start, 127, -128):       # only lane-dense candidates
        if hw % t == 0:
            return t
    return hw  # fall back to one full-row tile per image (always legal)


@functools.partial(jax.jit, static_argnames=("tile_m",))
def _simplenet_call(x_flat, w_in, w_hid, w_out, *, tile_m):
    B, _, HW = x_flat.shape
    return pl.pallas_call(
        simplenet_kernel,
        out_shape=jax.ShapeDtypeStruct((B, C_OUT, HW), jnp.float32),
        grid_spec=pltpu.PrefetchScalarGridSpec(
            num_scalar_prefetch=0,
            grid=(B, HW // tile_m),
            in_specs=[
                # (None, C, TM): batch dim squeezed out of the kernel view.
                pl.BlockSpec((None, C_IN, tile_m), lambda b, i: (b, 0, i)),
                # Whole-array weight blocks with constant index maps: the block
                # index never changes across grid steps, so the weights are
                # DMA'd once and stay resident in VMEM (~116 KiB padded total).
                pl.BlockSpec((MAXH, C_IN), lambda b, i: (0, 0)),
                pl.BlockSpec((DEPTH, MAXH, MAXH), lambda b, i: (0, 0, 0)),
                pl.BlockSpec((C_OUT, MAXH), lambda b, i: (0, 0)),
            ],
            out_specs=pl.BlockSpec((None, C_OUT, tile_m), lambda b, i: (b, 0, i)),
        ),
        compiler_params=pltpu.CompilerParams(
            # Both grid axes are independent -> eligible for megacore sharding.
            dimension_semantics=("parallel", "parallel"),
        ),
    )(x_flat, w_in, w_hid, w_out)


def simplenet_forward(x_nchw, w_in, w_hid, w_out, *, tile_m=None):
    """x_nchw: (B, 3, H, W) float32. Returns (B, 3, H, W) float32."""
    B, C, H, W = x_nchw.shape
    assert C == C_IN
    HW = H * W
    if tile_m is None:
        tile_m = _pick_tile(HW)
    assert HW % tile_m == 0, "H*W must be divisible by tile_m"
    assert tile_m % 128 == 0 or tile_m == HW, "tile_m must keep the lane axis dense"
    # TODO(synk): add a padded remainder tile for H*W with no 128-aligned divisor
    # below the tile cap (currently falls back to one full-row tile per image,
    # which is correct but untiled).

    x_flat = x_nchw.reshape(B, C_IN, HW)                      # free reshape
    out_flat = _simplenet_call(x_flat, w_in, w_hid, w_out, tile_m=tile_m)
    return out_flat.reshape(B, C_OUT, H, W)                   # free reshape


def init_params(key):
    """Deterministic weight init matching Conv2d(kernel_size=1, bias=False).

    PyTorch Conv2d weight shape is (out_c, in_c, 1, 1); we store the equivalent
    (out_c, in_c) matrices directly (matches the kernel's W @ h layout)."""
    k1, k2, k3 = jax.random.split(key, 3)
    w_in = jax.random.uniform(k1, (MAXH, C_IN), jnp.float32,
                              -1.0 / C_IN ** 0.5, 1.0 / C_IN ** 0.5)
    w_hid = jax.random.uniform(k2, (DEPTH, MAXH, MAXH), jnp.float32,
                               -1.0 / MAXH ** 0.5, 1.0 / MAXH ** 0.5)
    w_out = jax.random.uniform(k3, (C_OUT, MAXH), jnp.float32,
                               -1.0 / MAXH ** 0.5, 1.0 / MAXH ** 0.5)
    return w_in, w_hid, w_out


def reference_forward(x_nchw, w_in, w_hid, w_out):
    """Pure-JAX reference with identical semantics (per-pixel channel matmuls)."""
    B, C, H, W = x_nchw.shape
    h = x_nchw.reshape(B, C, H * W)
    h = jnp.tanh(jnp.einsum("oc,bcn->bon", w_in, h))
    for d in range(DEPTH):
        h = jnp.tanh(jnp.einsum("oc,bcn->bon", w_hid[d], h))
    y = jax.nn.sigmoid(jnp.einsum("oc,bcn->bon", w_out, h))
    return y.reshape(B, C_OUT, H, W)


if __name__ == "__main__":
    key = jax.random.PRNGKey(0)
    kx, kp = jax.random.split(key)

    # Small NCHW input consistent with Conv2d(3, ...): batch=2, C=3, H=W=16
    x = jax.random.normal(kx, (2, 3, 16, 16), jnp.float32)
    w_in, w_hid, w_out = init_params(kp)

    out = jax.block_until_ready(simplenet_forward(x, w_in, w_hid, w_out))
    ref = jax.block_until_ready(reference_forward(x, w_in, w_hid, w_out))

    assert out.shape == (2, 3, 16, 16)
    assert jnp.allclose(out, ref, atol=1e-5, rtol=1e-5), \
        float(jnp.max(jnp.abs(out - ref)))

    print("KERNEL_OK")
</pallas_src>

<mosaic_0001>
module attributes {stable_mosaic.version = 11 : i64} {
  func.func @simplenet_kernel(%arg0: i32, %arg1: i32, %arg2: memref<1x3x256xf32, #tpu.memory_space<vmem>>, %arg3: memref<25x3xf32, #tpu.memory_space<vmem>>, %arg4: memref<6x25x25xf32, #tpu.memory_space<vmem>>, %arg5: memref<3x25xf32, #tpu.memory_space<vmem>>, %arg6: memref<1x3x256xf32, #tpu.memory_space<vmem>>) attributes {dimension_semantics = [#tpu.dimension_semantics<parallel>, #tpu.dimension_semantics<parallel>], iteration_bounds = array<i64: 2, 1>, scalar_prefetch = 0 : i64, scratch_operands = 0 : i64, tpu.core_type = #tpu.core_type<tc>, window_params = [{transform_indices = @transform_0, window_bounds = array<i64: 1, 3, 256>}, {pipeline_mode = #tpu.pipeline_mode<synchronous>, transform_indices = @transform_1, window_bounds = array<i64: 25, 3>}, {pipeline_mode = #tpu.pipeline_mode<synchronous>, transform_indices = @transform_2, window_bounds = array<i64: 6, 25, 25>}, {pipeline_mode = #tpu.pipeline_mode<synchronous>, transform_indices = @transform_3, window_bounds = array<i64: 3, 25>}, {transform_indices = @transform_4, window_bounds = array<i64: 1, 3, 256>}]} {
    %c0 = arith.constant 0 : index
    %c0_0 = arith.constant 0 : index
    %c0_1 = arith.constant 0 : index
    %0 = vector.load %arg2[%c0, %c0_0, %c0_1] : memref<1x3x256xf32, #tpu.memory_space<vmem>>, vector<1x3x256xf32>
    %1 = vector.shape_cast %0 : vector<1x3x256xf32> to vector<3x256xf32>
    %c0_2 = arith.constant 0 : index
    %c0_3 = arith.constant 0 : index
    %2 = vector.load %arg3[%c0_2, %c0_3] : memref<25x3xf32, #tpu.memory_space<vmem>>, vector<25x3xf32>
    %3 = vector.extract_strided_slice %2 {offsets = [0, 0], sizes = [25, 1], strides = [1, 1]} : vector<25x3xf32> to vector<25x1xf32>
    %4 = vector.extract_strided_slice %1 {offsets = [0, 0], sizes = [1, 256], strides = [1, 1]} : vector<3x256xf32> to vector<1x256xf32>
    %5 = vector.broadcast %3 : vector<25x1xf32> to vector<25x256xf32>
    %6 = vector.broadcast %4 : vector<1x256xf32> to vector<25x256xf32>
    %7 = arith.mulf %5, %6 : vector<25x256xf32>
    %8 = vector.extract_strided_slice %2 {offsets = [0, 1], sizes = [25, 1], strides = [1, 1]} : vector<25x3xf32> to vector<25x1xf32>
    %9 = vector.extract_strided_slice %1 {offsets = [1, 0], sizes = [1, 256], strides = [1, 1]} : vector<3x256xf32> to vector<1x256xf32>
    %10 = vector.broadcast %8 : vector<25x1xf32> to vector<25x256xf32>
    %11 = vector.broadcast %9 : vector<1x256xf32> to vector<25x256xf32>
    %12 = arith.mulf %10, %11 : vector<25x256xf32>
    %13 = arith.addf %7, %12 : vector<25x256xf32>
    %14 = vector.extract_strided_slice %2 {offsets = [0, 2], sizes = [25, 1], strides = [1, 1]} : vector<25x3xf32> to vector<25x1xf32>
    %15 = vector.extract_strided_slice %1 {offsets = [2, 0], sizes = [1, 256], strides = [1, 1]} : vector<3x256xf32> to vector<1x256xf32>
    %16 = vector.broadcast %14 : vector<25x1xf32> to vector<25x256xf32>
    %17 = vector.broadcast %15 : vector<1x256xf32> to vector<25x256xf32>
    %18 = arith.mulf %16, %17 : vector<25x256xf32>
    %19 = arith.addf %13, %18 : vector<25x256xf32>
    %20 = math.tanh %19 : vector<25x256xf32>
    %c0_4 = arith.constant 0 : index
    %c0_5 = arith.constant 0 : index
    %c0_6 = arith.constant 0 : index
    %21 = vector.load %arg4[%c0_4, %c0_5, %c0_6] : memref<6x25x25xf32, #tpu.memory_space<vmem>>, vector<1x25x25xf32>
    %22 = vector.shape_cast %21 : vector<1x25x25xf32> to vector<25x25xf32>
    %cst = arith.constant dense<0.000000e+00> : vector<25x256xf32>
    %23 = tpu.matmul %22, %20, %cst {dimension_numbers = #tpu.dot_dimension_numbers<[1], [0], [0], [1], [0, 0, 1, 1], [], []>} : vector<25x25xf32>, vector<25x256xf32>, vector<25x256xf32> -> vector<25x256xf32>
    %24 = math.tanh %23 : vector<25x256xf32>
    %c1 = arith.constant 1 : index
    %c0_7 = arith.constant 0 : index
    %c0_8 = arith.constant 0 : index
    %25 = vector.load %arg4[%c1, %c0_7, %c0_8] : memref<6x25x25xf32, #tpu.memory_space<vmem>>, vector<1x25x25xf32>
    %26 = vector.shape_cast %25 : vector<1x25x25xf32> to vector<25x25xf32>
    %cst_9 = arith.constant dense<0.000000e+00> : vector<25x256xf32>
    %27 = tpu.matmul %26, %24, %cst_9 {dimension_numbers = #tpu.dot_dimension_numbers<[1], [0], [0], [1], [0, 0, 1, 1], [], []>} : vector<25x25xf32>, vector<25x256xf32>, vector<25x256xf32> -> vector<25x256xf32>
    %28 = math.tanh %27 : vector<25x256xf32>
    %c2 = arith.constant 2 : index
    %c0_10 = arith.constant 0 : index
    %c0_11 = arith.constant 0 : index
    %29 = vector.load %arg4[%c2, %c0_10, %c0_11] : memref<6x25x25xf32, #tpu.memory_space<vmem>>, vector<1x25x25xf32>
    %30 = vector.shape_cast %29 : vector<1x25x25xf32> to vector<25x25xf32>
    %cst_12 = arith.constant dense<0.000000e+00> : vector<25x256xf32>
    %31 = tpu.matmul %30, %28, %cst_12 {dimension_numbers = #tpu.dot_dimension_numbers<[1], [0], [0], [1], [0, 0, 1, 1], [], []>} : vector<25x25xf32>, vector<25x256xf32>, vector<25x256xf32> -> vector<25x256xf32>
    %32 = math.tanh %31 : vector<25x256xf32>
    %c3 = arith.constant 3 : index
    %c0_13 = arith.constant 0 : index
    %c0_14 = arith.constant 0 : index
    %33 = vector.load %arg4[%c3, %c0_13, %c0_14] : memref<6x25x25xf32, #tpu.memory_space<vmem>>, vector<1x25x25xf32>
    %34 = vector.shape_cast %33 : vector<1x25x25xf32> to vector<25x25xf32>
    %cst_15 = arith.constant dense<0.000000e+00> : vector<25x256xf32>
    %35 = tpu.matmul %34, %32, %cst_15 {dimension_numbers = #tpu.dot_dimension_numbers<[1], [0], [0], [1], [0, 0, 1, 1], [], []>} : vector<25x25xf32>, vector<25x256xf32>, vector<25x256xf32> -> vector<25x256xf32>
    %36 = math.tanh %35 : vector<25x256xf32>
    %c4 = arith.constant 4 : index
    %c0_16 = arith.constant 0 : index
    %c0_17 = arith.constant 0 : index
    %37 = vector.load %arg4[%c4, %c0_16, %c0_17] : memref<6x25x25xf32, #tpu.memory_space<vmem>>, vector<1x25x25xf32>
    %38 = vector.shape_cast %37 : vector<1x25x25xf32> to vector<25x25xf32>
    %cst_18 = arith.constant dense<0.000000e+00> : vector<25x256xf32>
    %39 = tpu.matmul %38, %36, %cst_18 {dimension_numbers = #tpu.dot_dimension_numbers<[1], [0], [0], [1], [0, 0, 1, 1], [], []>} : vector<25x25xf32>, vector<25x256xf32>, vector<25x256xf32> -> vector<25x256xf32>
    %40 = math.tanh %39 : vector<25x256xf32>
    %c5 = arith.constant 5 : index
    %c0_19 = arith.constant 0 : index
    %c0_20 = arith.constant 0 : index
    %41 = vector.load %arg4[%c5, %c0_19, %c0_20] : memref<6x25x25xf32, #tpu.memory_space<vmem>>, vector<1x25x25xf32>
    %42 = vector.shape_cast %41 : vector<1x25x25xf32> to vector<25x25xf32>
    %cst_21 = arith.constant dense<0.000000e+00> : vector<25x256xf32>
    %43 = tpu.matmul %42, %40, %cst_21 {dimension_numbers = #tpu.dot_dimension_numbers<[1], [0], [0], [1], [0, 0, 1, 1], [], []>} : vector<25x25xf32>, vector<25x256xf32>, vector<25x256xf32> -> vector<25x256xf32>
    %44 = math.tanh %43 : vector<25x256xf32>
    %c0_22 = arith.constant 0 : index
    %c0_23 = arith.constant 0 : index
    %45 = vector.load %arg5[%c0_22, %c0_23] : memref<3x25xf32, #tpu.memory_space<vmem>>, vector<3x25xf32>
    %cst_24 = arith.constant dense<0.000000e+00> : vector<3x256xf32>
    %46 = tpu.matmul %45, %44, %cst_24 {dimension_numbers = #tpu.dot_dimension_numbers<[1], [0], [0], [1], [0, 0, 1, 1], [], []>} : vector<3x25xf32>, vector<25x256xf32>, vector<3x256xf32> -> vector<3x256xf32>
    %47 = arith.negf %46 : vector<3x256xf32>
    %48 = math.exp %47 : vector<3x256xf32>
    %cst_25 = arith.constant 1.000000e+00 : f32
    %49 = vector.broadcast %cst_25 : f32 to vector<3x256xf32>
    %50 = arith.addf %49, %48 : vector<3x256xf32>
    %51 = arith.divf %49, %50 : vector<3x256xf32>
    %c0_26 = arith.constant 0 : index
    %c0_27 = arith.constant 0 : index
    %c0_28 = arith.constant 0 : index
    %52 = vector.load %arg6[%c0_26, %c0_27, %c0_28] : memref<1x3x256xf32, #tpu.memory_space<vmem>>, vector<1x3x256xf32>
    %53 = vector.shape_cast %52 : vector<1x3x256xf32> to vector<3x256xf32>
    %54 = vector.shape_cast %51 : vector<3x256xf32> to vector<1x3x256xf32>
    tpu.vector_store %arg6[%c0_26, %c0_27, %c0_28], %54 {strides = array<i32>} : memref<1x3x256xf32, #tpu.memory_space<vmem>>, vector<1x3x256xf32>,
    return
  }
  func.func @transform_0(%arg0: i32, %arg1: i32) -> (i32, i32, i32) {
    %c0_i32 = arith.constant 0 : i32
    %c0_i32_0 = arith.constant 0 : i32
    return %arg0, %c0_i32, %arg1 : i32, i32, i32
  }
  func.func @transform_1(%arg0: i32, %arg1: i32) -> (i32, i32) {
    %c0_i32 = arith.constant 0 : i32
    %c0_i32_0 = arith.constant 0 : i32
    %c0_i32_1 = arith.constant 0 : i32
    return %c0_i32, %c0_i32_0 : i32, i32
  }
  func.func @transform_2(%arg0: i32, %arg1: i32) -> (i32, i32, i32) {
    %c0_i32 = arith.constant 0 : i32
    %c0_i32_0 = arith.constant 0 : i32
    %c0_i32_1 = arith.constant 0 : i32
    %c0_i32_2 = arith.constant 0 : i32
    return %c0_i32, %c0_i32_0, %c0_i32_1 : i32, i32, i32
  }
  func.func @transform_3(%arg0: i32, %arg1: i32) -> (i32, i32) {
    %c0_i32 = arith.constant 0 : i32
    %c0_i32_0 = arith.constant 0 : i32
    %c0_i32_1 = arith.constant 0 : i32
    return %c0_i32, %c0_i32_0 : i32, i32
  }
  func.func @transform_4(%arg0: i32, %arg1: i32) -> (i32, i32, i32) {
    %c0_i32 = arith.constant 0 : i32
    %c0_i32_0 = arith.constant 0 : i32
    return %arg0, %c0_i32, %arg1 : i32, i32, i32
  }
}

</mosaic_0001>

<llo_original>
// kernel: _simplenet_call.1
$region0: #{_simplenet_call.1}
  #allocation0 [shape = 'u32[]', space=smem, size = 0x4, offset = 0x4, fixed_abs, tag = 'smem constant byte address 0x4 - core index']
  #allocation1 [shape = 'u32[144,128]{1,0:T(1,128)}', space=vmem, size = 0x12000, scoped, tag = 'internal scratch']
  %s0 = inlined_call_operand.vmem [shape: f32[2,3,256], index: 0, kind: input, shape index: {}]
  %s1 = inlined_call_operand.vmem [shape: f32[25,3], index: 1, kind: input, shape index: {}]
  %s2 = inlined_call_operand.hbm [shape: f32[6,25,25], index: 2, kind: input, shape index: {}]
  %s3 = inlined_call_operand.vmem [shape: f32[3,25], index: 3, kind: input, shape index: {}]
  %s4 = inlined_call_operand.vmem [shape: f32[2,3,256], index: 4, kind: output, shape index: {}]
  %s5 = sld [smem:[#allocation0]]
  $region53: #{_simplenet_call.1} parent=0
    _
  %s7 = ssub.s32 1, %s5
  %s8 = scalar_select 0, %s7, %s5
  $region1: #{_simplenet_call.1} parent=0
    #allocation2 [shape = 'u8[98304]{0}', space=vmem, size = 0x18000, scoped, tag = 'input window, operand 2, single buffered']
    #allocation3 [shape = 's32[2]{0}', space=sflag, size = 0x8, scoped, tag = 'scoped memory for _simplenet_call.1']
    %9 = vsyncpa [#allocation3], 0
    loop: start=0, step=1, limit=4
    $region2: #{_simplenet_call.1} parent=1 // loop_pre_header
      _
    $region3: #{_simplenet_call.1} parent=1 // loop_header
      %s11 = sphi 0, %s15
      %p12 = scmp.ge.s32.totalorder %s11, 4
      %s18 = sphi 0, %s30
      %s19 = sphi 0, %s26
      %s20 = sphi 0, %s18
      %s21 = sphi 0, %s19
      %s22 = sphi 0, %s20
      %s23 = sphi 0, %s21
      %s35 = sphi 0, %s37
      %s38 = sphi 0, %s35
      %s39 = sphi 0, %s38
      %s55 = sphi 0, %s39
      %s59 = sphi 0, %s59
      %s61 = sphi 0, %s59
      %s62 = sphi 0, %s61
      %s76 = sphi 0, %s62
      %s80 = sphi 0, %s80
      %s82 = sphi 0, %s80
      %s83 = sphi 0, %s82
      %s97 = sphi 0, %s83
      %s101 = sphi 0, %s101
      %s103 = sphi 0, %s101
      %s104 = sphi 0, %s103
      %s118 = sphi 0, %s104
      %s126 = sphi 0, %s128
      %s129 = sphi 0, %s126
      %s130 = sphi 0, %s129
      %s146 = sphi 0, %s130
    $region4: #{_simplenet_call.1} parent=1 // loop_header_branch
      %14 = sbr.rel (%p12) target = $region8
    $region5: #{_simplenet_call.1} parent=1 // loop_body
      %s16 = ssub.s32 %s11, 1
      %s17 = ssub.s32 %s11, 2
      %s24 = sadd.s32 1, %s19
      %p25 = scmp.ge.s32.totalorder %s24, 1
      %s26 = scalar_select %p25, 0, %s24
      %s27 = sadd.s32 1, %s18
      %s28 = scalar_select %p25, %s27, %s18
      %p29 = scmp.ge.s32.totalorder %s28, 2
      %s30 = scalar_select %p29, 0, %s28
      %s31 = ssub.s32 %s18, %s30
      %s32 = ssub.s32 %s19, %s26
      %s33 = sor.u32 %s31, %s32
      %p34 = scmp.eq.s32.totalorder %s33, 0
      %s36 = sadd.s32 %s35, 1
      %s37 = scalar_select %p34, %s35, %s36
      %p40 = pneg %p34
      %p41 = scmp.eq.s32.totalorder %s11, 1
      %p42 = por %p40, %p41
      %p43 = scmp.ne.s32.totalorder %s35, %s38
      %p44 = scmp.eq.s32.totalorder %s11, 0
      %p45 = por %p43, %p44
      %p46 = scmp.ne.s32.totalorder %s35, %s38
      %p47 = scmp.eq.s32.totalorder %s16, 1
      %p48 = por %p46, %p47
      %p49 = scmp.ne.s32.totalorder %s38, %s39
      %p50 = scmp.eq.s32.totalorder %s16, 0
      %p51 = por %p49, %p50
      %p52 = scmp.ne.s32.totalorder %s38, %s39
      %p53 = scmp.eq.s32.totalorder %s17, 1
      %p54 = por %p52, %p53
      %p56 = scmp.ne.s32.totalorder %s39, %s55
      %p57 = scmp.eq.s32.totalorder %s17, 0
      %p58 = por %p56, %p57
      %s60 = sadd.s32 %s59, 1
      %p63 = scmp.eq.s32.totalorder %s11, 1
      %p64 = scmp.ne.s32.totalorder %s59, %s61
      %p65 = scmp.eq.s32.totalorder %s11, 0
      %p66 = por %p64, %p65
      %p67 = scmp.ne.s32.totalorder %s59, %s61
      %p68 = scmp.eq.s32.totalorder %s16, 1
      %p69 = por %p67, %p68
      %p70 = scmp.ne.s32.totalorder %s61, %s62
      %p71 = scmp.eq.s32.totalorder %s16, 0
      %p72 = por %p70, %p71
      %p73 = scmp.ne.s32.totalorder %s61, %s62
      %p74 = scmp.eq.s32.totalorder %s17, 1
      %p75 = por %p73, %p74
      %p77 = scmp.ne.s32.totalorder %s62, %s76
      %p78 = scmp.eq.s32.totalorder %s17, 0
      %p79 = por %p77, %p78
      %s81 = sadd.s32 %s80, 1
      %p84 = scmp.eq.s32.totalorder %s11, 1
      %p85 = scmp.ne.s32.totalorder %s80, %s82
      %p86 = scmp.eq.s32.totalorder %s11, 0
      %p87 = por %p85, %p86
      %p88 = scmp.ne.s32.totalorder %s80, %s82
      %p89 = scmp.eq.s32.totalorder %s16, 1
      %p90 = por %p88, %p89
      %p91 = scmp.ne.s32.totalorder %s82, %s83
      %p92 = scmp.eq.s32.totalorder %s16, 0
      %p93 = por %p91, %p92
      %p94 = scmp.ne.s32.totalorder %s82, %s83
      %p95 = scmp.eq.s32.totalorder %s17, 1
      %p96 = por %p94, %p95
      %p98 = scmp.ne.s32.totalorder %s83, %s97
      %p99 = scmp.eq.s32.totalorder %s17, 0
      %p100 = por %p98, %p99
      %s102 = sadd.s32 %s101, 1
      %p105 = scmp.eq.s32.totalorder %s11, 1
      %p106 = scmp.ne.s32.totalorder %s101, %s103
      %p107 = scmp.eq.s32.totalorder %s11, 0
      %p108 = por %p106, %p107
      %p109 = scmp.ne.s32.totalorder %s101, %s103
      %p110 = scmp.eq.s32.totalorder %s16, 1
      %p111 = por %p109, %p110
      %p112 = scmp.ne.s32.totalorder %s103, %s104
      %p113 = scmp.eq.s32.totalorder %s16, 0
      %p114 = por %p112, %p113
      %p115 = scmp.ne.s32.totalorder %s103, %s104
      %p116 = scmp.eq.s32.totalorder %s17, 1
      %p117 = por %p115, %p116
      %p119 = scmp.ne.s32.totalorder %s104, %s118
      %p120 = scmp.eq.s32.totalorder %s17, 0
      %p121 = por %p119, %p120
      %s122 = ssub.s32 %s18, %s30
      %s123 = ssub.s32 %s19, %s26
      %s124 = sor.u32 %s122, %s123
      %p125 = scmp.eq.s32.totalorder %s124, 0
      %s127 = sadd.s32 %s126, 1
      %s128 = scalar_select %p125, %s126, %s127
      %p131 = pneg %p125
      %p132 = scmp.eq.s32.totalorder %s11, 1
      %p133 = por %p131, %p132
      %p134 = scmp.ne.s32.totalorder %s126, %s129
      %p135 = scmp.eq.s32.totalorder %s11, 0
      %p136 = por %p134, %p135
      %p137 = scmp.ne.s32.totalorder %s126, %s129
      %p138 = scmp.eq.s32.totalorder %s16, 1
      %p139 = por %p137, %p138
      %p140 = scmp.ne.s32.totalorder %s129, %s130
      %p141 = scmp.eq.s32.totalorder %s16, 0
      %p142 = por %p140, %p141
      %p143 = scmp.ne.s32.totalorder %s129, %s130
      %p144 = scmp.eq.s32.totalorder %s17, 1
      %p145 = por %p143, %p144
      %p147 = scmp.ne.s32.totalorder %s130, %s146
      %p148 = scmp.eq.s32.totalorder %s17, 0
      %p149 = por %p147, %p148
      %p150 = scmp.le.s32.totalorder 1, %s11
      %p151 = scmp.lt.s32.totalorder %s11, 3
      %p152 = pnand %p150, %p151
      %p153 = pneg %p152
      // Predicated region
      $region9: #{_simplenet_call.1} parent=5 // pred_check
        _
      $region10: #{_simplenet_call.1} parent=5 // pred_check_branch
        %155 = sbr.rel (%p152) target = $region12
      $region11: #{_simplenet_call.1} parent=5 // pred_region
        %s156 = ssub.s32 %s11, 1
        // Predicated region
        $region13: #{_simplenet_call.1} parent=11 // pred_check
          %p157 = pneg %p72
        $region14: #{_simplenet_call.1} parent=11 // pred_check_branch
          %159 = sbr.rel (%p157) target = $region16
        $region15: #{_simplenet_call.1} parent=11 // pred_region
          _
        $region16: #{_simplenet_call.1} parent=11 // pred_fallthru
          _
        // Predicated region
        $region17: #{_simplenet_call.1} parent=11 // pred_check
          %p160 = pneg %p93
        $region18: #{_simplenet_call.1} parent=11 // pred_check_branch
          %162 = sbr.rel (%p160) target = $region20
        $region19: #{_simplenet_call.1} parent=11 // pred_region
          %s164 = ssub.s32 3072, 3072
          %165 = vsyncadd [#allocation3], %s164
          %s166 = sshll.u32 [#allocation2], 4
          %s167 = int_to_ptr.vmem [resolvable:$true] %s166
          %172 = dma.hbm_to_vmem [thread:$0]  %s2, 3072, %s167, [#allocation3], 128, 128, 8
        $region20: #{_simplenet_call.1} parent=11 // pred_fallthru
          _
        // Predicated region
        $region21: #{_simplenet_call.1} parent=11 // pred_check
          %p173 = pneg %p114
        $region22: #{_simplenet_call.1} parent=11 // pred_check_branch
          %175 = sbr.rel (%p173) target = $region24
        $region23: #{_simplenet_call.1} parent=11 // pred_region
          _
        $region24: #{_simplenet_call.1} parent=11 // pred_fallthru
          _
      $region12: #{_simplenet_call.1} parent=5 // pred_fallthru
        _
      %p176 = scmp.lt.s32.totalorder %s11, 2
      // Predicated region
      $region25: #{_simplenet_call.1} parent=5 // pred_check
        %p177 = pneg %p176
      $region26: #{_simplenet_call.1} parent=5 // pred_check_branch
        %179 = sbr.rel (%p177) target = $region28
      $region27: #{_simplenet_call.1} parent=5 // pred_region
        // Predicated region
        $region29: #{_simplenet_call.1} parent=27 // pred_check
          %p180 = pneg %p45
        $region30: #{_simplenet_call.1} parent=27 // pred_check_branch
          %182 = sbr.rel (%p180) target = $region32
        $region31: #{_simplenet_call.1} parent=27 // pred_region
          %s183 = smul.u32 2, %s19
          %p184 = scmp.lt.s32.totalorder %s18, 1
          %s185 = scalar_select %p184, %s18, 1
          %p186 = scmp.lt.s32.totalorder %s183, 1
          %s187 = scalar_select %p186, %s183, 1
          %s188 = smul.addr %s185, 2
          %s189 = sadd.s32 %s187, %s188
          %s190 = smul.addr %s189, 4
          %s191 = scalar_lea.vmem %s0, %s190
          %s192 = smul.u32 2, %s19
        $region32: #{_simplenet_call.1} parent=27 // pred_fallthru
          _
      $region28: #{_simplenet_call.1} parent=5 // pred_fallthru
        _
      %p193 = scmp.le.s32.totalorder 1, %s11
      %p194 = scmp.lt.s32.totalorder %s11, 3
      %p195 = pnand %p193, %p194
      %p196 = pneg %p195
      // Predicated region
      $region33: #{_simplenet_call.1} parent=5 // pred_check
        _
      $region34: #{_simplenet_call.1} parent=5 // pred_check_branch
        %198 = sbr.rel (%p195) target = $region36
      $region35: #{_simplenet_call.1} parent=5 // pred_region
        %s199 = ssub.s32 %s11, 1
        // Predicated region
        $region37: #{_simplenet_call.1} parent=35 // pred_check
          %p200 = pneg %p93
        $region38: #{_simplenet_call.1} parent=35 // pred_check_branch
          %202 = sbr.rel (%p200) target = $region40
        $region39: #{_simplenet_call.1} parent=35 // pred_region
          %203 = dma.done [#allocation3], 3072
        $region40: #{_simplenet_call.1} parent=35 // pred_fallthru
          _
        %s204 = smul.u32 2, %s21
        %p205 = scmp.lt.s32.totalorder %s20, 1
        %s206 = scalar_select %p205, %s20, 1
        %p207 = scmp.lt.s32.totalorder %s204, 1
        %s208 = scalar_select %p207, %s204, 1
        %s209 = smul.addr %s206, 2
        %s210 = sadd.s32 %s208, %s209
        %s211 = smul.addr %s210, 4
        %s212 = scalar_lea.vmem %s0, %s211
        %p213 = pneg %p51
        %p214 = pneg %p48
        %p215 = pneg %p72
        %p216 = pneg %p69
        %p217 = pneg %p93
        %p218 = pneg %p90
        %p219 = pneg %p114
        %p220 = pneg %p111
        %p221 = pneg %p142
        %p222 = pneg %p139
        %s223 = smul.u32 2, %s21
        %p224 = scmp.lt.s32.totalorder %s20, 1
        %s225 = scalar_select %p224, %s20, 1
        %p226 = scmp.lt.s32.totalorder %s223, 1
        %s227 = scalar_select %p226, %s223, 1
        %s228 = smul.addr %s225, 2
        %s229 = sadd.s32 %s227, %s228
        %s230 = smul.addr %s229, 4
        %s231 = scalar_lea.vmem %s4, %s230
        %s232 = smul.u32 2, %s21
        %p233 = scmp.lt.s32.totalorder %s20, 1
        %s234 = scalar_select %p233, %s20, 1
        %p235 = scmp.lt.s32.totalorder %s232, 1
        %s236 = scalar_select %p235, %s232, 1
        %s237 = smul.addr %s234, 2
        %s238 = sadd.s32 %s236, %s237
        %s239 = smul.addr %s238, 4
        %s240 = scalar_lea.vmem %s0, %s239
        %s241 = smul.u32 2, %s21
        %s242 = smul.u32 2, %s21
        %p243 = scmp.lt.s32.totalorder %s20, 1
        %s244 = scalar_select %p243, %s20, 1
        %p245 = scmp.lt.s32.totalorder %s242, 1
        %s246 = scalar_select %p245, %s242, 1
        %s247 = smul.addr %s244, 2
        %s248 = sadd.s32 %s246, %s247
        %s249 = smul.addr %s248, 4
        %s250 = scalar_lea.vmem %s4, %s249
        %s251 = smul.u32 2, %s21
        %v252 = vld [vmem:[%s240] sm:$0x77]
        %v253 = vld [vmem:[%s1] sm:$0xff]
        %v254 = vld [vmem:[%s1 + $0x8] sm:$0xff]
        %v255 = vld [vmem:[%s1 + $0x10] sm:$0xff]
        %v256 = vld [vmem:[%s1 + $0x18] sm:$0x1]
        %258 = vset.pattern.permute.xlu0 0
        %259 = vperm.xlu0 %258, %v253
        %v260 = vpop.permute.xlu0 %259
        %263 = vset.pattern.permute.xlu0 0
        %264 = vperm.xlu0 %263, %v254
        %v265 = vpop.permute.xlu0 %264
        %268 = vset.pattern.permute.xlu0 0
        %269 = vperm.xlu0 %268, %v255
        %v270 = vpop.permute.xlu0 %269
        %273 = vset.pattern.permute.xlu0 0
        %274 = vperm.xlu0 %273, %v256
        %v275 = vpop.permute.xlu0 %274
        %v278 = vlaneseq
        %v279 = vshrl.u32 %v278, 7
        %v280 = vsub.s32 0, %v279
        %v281 = vrot.slane %v252, %v280
        %v282 = vlaneseq
        %v283 = vshrl.u32 %v282, 7
        %v284 = vsub.s32 4, %v283
        %v285 = vrot.slane %v252, %v284
        %v288 = vlaneseq
        %v289 = vshrl.u32 %v288, 7
        %v290 = vsub.s32 0, %v289
        %v291 = vrot.slane %v281, %v290
        %v292 = vlaneseq
        %v293 = vshrl.u32 %v292, 7
        %v294 = vsub.s32 0, %v293
        %v295 = vrot.slane %v285, %v294
        %v296 = vmul.f32 %v260, %v291
        %v297 = vmul.f32 %v260, %v295
        %v298 = vmul.f32 %v265, %v291
        %v299 = vmul.f32 %v265, %v295
        %v300 = vmul.f32 %v270, %v291
        %v301 = vmul.f32 %v270, %v295
        %v302 = vmul.f32 %v275, %v291
        %v303 = vmul.f32 %v275, %v295
        %304 = vset.pattern.permute.xlu0 1
        %305 = vperm.xlu0 %304, %v253
        %v306 = vpop.permute.xlu0 %305
        %308 = vset.pattern.permute.xlu0 1
        %309 = vperm.xlu0 %308, %v254
        %v310 = vpop.permute.xlu0 %309
        %312 = vset.pattern.permute.xlu0 1
        %313 = vperm.xlu0 %312, %v255
        %v314 = vpop.permute.xlu0 %313
        %316 = vset.pattern.permute.xlu0 1
        %317 = vperm.xlu0 %316, %v256
        %v318 = vpop.permute.xlu0 %317
        %v320 = vlaneseq
        %v321 = vshrl.u32 %v320, 7
        %v322 = vsub.s32 1, %v321
        %v323 = vrot.slane %v252, %v322
        %v324 = vlaneseq
        %v325 = vshrl.u32 %v324, 7
        %v326 = vsub.s32 5, %v325
        %v327 = vrot.slane %v252, %v326
        %v330 = vlaneseq
        %v331 = vshrl.u32 %v330, 7
        %v332 = vsub.s32 1, %v331
        %v333 = vrot.slane %v323, %v332
        %v334 = vlaneseq
        %v335 = vshrl.u32 %v334, 7
        %v336 = vsub.s32 1, %v335
        %v337 = vrot.slane %v327, %v336
        %v338 = vmul.f32 %v306, %v333
        %v339 = vmul.f32 %v306, %v337
        %v340 = vmul.f32 %v310, %v333
        %v341 = vmul.f32 %v310, %v337
        %v342 = vmul.f32 %v314, %v333
        %v343 = vmul.f32 %v314, %v337
        %v344 = vmul.f32 %v318, %v333
        %v345 = vmul.f32 %v318, %v337
        %v346 = vadd.f32 %v296, %v338
        %v347 = vadd.f32 %v297, %v339
        %v348 = vadd.f32 %v298, %v340
        %v349 = vadd.f32 %v299, %v341
        %v350 = vadd.f32 %v300, %v342
        %v351 = vadd.f32 %v301, %v343
        %v352 = vadd.f32 %v302, %v344
        %v353 = vadd.f32 %v303, %v345
        %354 = vset.pattern.permute.xlu0 2
        %355 = vperm.xlu0 %354, %v253
        %v356 = vpop.permute.xlu0 %355
        %358 = vset.pattern.permute.xlu0 2
        %359 = vperm.xlu0 %358, %v254
        %v360 = vpop.permute.xlu0 %359
        %362 = vset.pattern.permute.xlu0 2
        %363 = vperm.xlu0 %362, %v255
        %v364 = vpop.permute.xlu0 %363
        %366 = vset.pattern.permute.xlu0 2
        %367 = vperm.xlu0 %366, %v256
        %v368 = vpop.permute.xlu0 %367
        %v370 = vlaneseq
        %v371 = vshrl.u32 %v370, 7
        %v372 = vsub.s32 2, %v371
        %v373 = vrot.slane %v252, %v372
        %v374 = vlaneseq
        %v375 = vshrl.u32 %v374, 7
        %v376 = vsub.s32 6, %v375
        %v377 = vrot.slane %v252, %v376
        %v380 = vlaneseq
        %v381 = vshrl.u32 %v380, 7
        %v382 = vsub.s32 2, %v381
        %v383 = vrot.slane %v373, %v382
        %v384 = vlaneseq
        %v385 = vshrl.u32 %v384, 7
        %v386 = vsub.s32 2, %v385
        %v387 = vrot.slane %v377, %v386
        %v388 = vmul.f32 %v356, %v383
        %v389 = vmul.f32 %v356, %v387
        %v390 = vmul.f32 %v360, %v383
        %v391 = vmul.f32 %v360, %v387
        %v392 = vmul.f32 %v364, %v383
        %v393 = vmul.f32 %v364, %v387
        %v394 = vmul.f32 %v368, %v383
        %v395 = vmul.f32 %v368, %v387
        %v396 = vadd.f32 %v346, %v388
        %v397 = vadd.f32 %v347, %v389
        %v398 = vadd.f32 %v348, %v390
        %v399 = vadd.f32 %v349, %v391
        %v400 = vadd.f32 %v350, %v392
        %v401 = vadd.f32 %v351, %v393
        %v402 = vadd.f32 %v352, %v394
        %v403 = vadd.f32 %v353, %v395
        %v404 = vtanh.pop %v396
        %v405 = vtanh.pop %v397
        %v406 = vtanh.pop %v398
        %v407 = vtanh.pop %v399
        %v408 = vtanh.pop %v400
        %v409 = vtanh.pop %v401
        %v410 = vtanh.pop %v402
        %v411 = vtanh.pop %v403
        %v412 = vld [vmem:[#allocation2] sm:$0xff]
        %v413 = vld [vmem:[#allocation2 + $0x8] sm:$0xff]
        %v414 = vld [vmem:[#allocation2 + $0x10] sm:$0xff]
        %v415 = vld [vmem:[#allocation2 + $0x18] sm:$0x1]
        %vm416 = vcmask 203776
        %v418 = vsel %vm416, %v412, 0
        %v421 = vsel %vm416, %v413, 0
        %v424 = vsel %vm416, %v414, 0
        %v427 = vsel %vm416, %v415, 0
        %vm429 = vcmask 1040384
        %v431 = vsel %vm429, %v410, 0
        %v434 = vsel %vm429, %v411, 0
        %436 = vmatprep.subr.mxu0 %v405
        %437 = vmatpush1.msra.mxu0 %v404
        %438 = vmatprep.subr.mxu0 %v407
        %439 = vmatpush1.msra.mxu0 %v406
        %440 = vmatprep.subr.mxu0 %v409
        %441 = vmatpush1.msra.mxu0 %v408
        %442 = vmatprep.subr.mxu0 %v434
        %443 = vmatpush1.msra.mxu0 %v431
        %444 = vmatprep.subr.mxu0 0.0
        %445 = vmatpush1.msra.mxu0 0.0
        %446 = vmatprep.subr.mxu0 0.0
        %447 = vmatpush1.msra.mxu0 0.0
        %448 = vmatprep.subr.mxu0 0.0
        %449 = vmatpush1.msra.mxu0 0.0
        %450 = vmatprep.subr.mxu0 0.0
        %451 = vmatpush1.msra.mxu0 0.0
        %452 = vmatprep.subr.mxu0 0.0
        %453 = vmatpush1.msra.mxu0 0.0
        %454 = vmatprep.subr.mxu0 0.0
        %455 = vmatpush1.msra.mxu0 0.0
        %456 = vmatprep.subr.mxu0 0.0
        %457 = vmatpush1.msra.mxu0 0.0
        %458 = vmatprep.subr.mxu0 0.0
        %459 = vmatpush1.msra.mxu0 0.0
        %460 = vmatprep.subr.mxu0 0.0
        %461 = vmatpush1.msra.mxu0 0.0
        %462 = vmatprep.subr.mxu0 0.0
        %463 = vmatpush1.msra.mxu0 0.0
        %464 = vmatprep.subr.mxu0 0.0
        %465 = vmatpush1.msra.mxu0 0.0
        %466 = vmatprep.subr.mxu0 0.0
        %467 = vmatpush1.msra.mxu0 0.0
        %468 = vmatprep.subr.mxu0 0.0
        %469 = vmatpush1.msra.mxu0 0.0
        %470 = vmatprep.subr.mxu0 0.0
        %471 = vmatpush1.msra.mxu0 0.0
        %472 = vmatprep.subr.mxu0 0.0
        %473 = vmatpush1.msra.mxu0 0.0
        %474 = vmatprep.subr.mxu0 0.0
        %475 = vmatpush1.msra.mxu0 0.0
        %476 = vmatprep.subr.mxu0 0.0
        %477 = vmatpush1.msra.mxu0 0.0
        %478 = vmatprep.subr.mxu0 0.0
        %479 = vmatpush1.msra.mxu0 0.0
        %480 = vmatprep.subr.mxu0 0.0
        %481 = vmatpush1.msra.mxu0 0.0
        %482 = vmatprep.subr.mxu0 0.0
        %483 = vmatpush1.msra.mxu0 0.0
        %484 = vmatprep.subr.mxu0 0.0
        %485 = vmatpush1.msra.mxu0 0.0
        %486 = vmatprep.subr.mxu0 0.0
        %487 = vmatpush1.msra.mxu0 0.0
        %488 = vmatprep.subr.mxu0 0.0
        %489 = vmatpush1.msra.mxu0 0.0
        %490 = vmatprep.subr.mxu0 0.0
        %491 = vmatpush1.msra.mxu0 0.0
        %492 = vmatprep.subr.mxu0 0.0
        %493 = vmatpush1.msra.mxu0 0.0
        %494 = vmatprep.subr.mxu0 0.0
        %495 = vmatpush1.msra.mxu0 0.0
        %496 = vmatprep.subr.mxu0 0.0
        %497 = vmatpush1.msra.mxu0 0.0
        %498 = vmatprep.subr.mxu0 0.0
        %499 = vmatpush1.msra.mxu0 0.0
        %500 = vmatprep.mubr.f32.mxu0 0.0
        %501 = vmatmul.mubr.f32.gmra.mrb[0].mxu0 %v418
        %v502 = vpop.f32.mrb[0].mxu0
        %v503 = vadd.f32 0.0, %v502
        %v504 = vpop.f32.mrb[0].mxu0
        %v505 = vadd.f32 0.0, %v504
        %506 = vmatprep.mubr.f32.mxu0 0.0
        %507 = vmatmul.mubr.f32.gmra.mrb[0].mxu0 %v421
        %v508 = vpop.f32.mrb[0].mxu0
        %v509 = vadd.f32 0.0, %v508
        %v510 = vpop.f32.mrb[0].mxu0
        %v511 = vadd.f32 0.0, %v510
        %512 = vmatprep.mubr.f32.mxu0 0.0
        %513 = vmatmul.mubr.f32.gmra.mrb[0].mxu0 %v424
        %v514 = vpop.f32.mrb[0].mxu0
        %v515 = vadd.f32 0.0, %v514
        %v516 = vpop.f32.mrb[0].mxu0
        %v517 = vadd.f32 0.0, %v516
        %518 = vmatprep.mubr.f32.mxu0 0.0
        %519 = vmatmul.mubr.f32.gmra.mrb[0].mxu0 %v427
        %v520 = vpop.f32.mrb[0].mxu0
        %v521 = vadd.f32 0.0, %v520
        %v522 = vpop.f32.mrb[0].mxu0
        %v523 = vadd.f32 0.0, %v522
        %524 = vdwg.mxu0
        %v525 = vtanh.pop %v503
        %v526 = vtanh.pop %v505
        %v527 = vtanh.pop %v509
        %v528 = vtanh.pop %v511
        %v529 = vtanh.pop %v515
        %v530 = vtanh.pop %v517
        %v531 = vtanh.pop %v521
        %v532 = vtanh.pop %v523
        %s533 = scalar_lea.vmem [#allocation2], 32
        %v534 = vld [vmem:[%s533] sm:$0xff]
        %v535 = vld [vmem:[%s533 + $0x8] sm:$0xff]
        %v536 = vld [vmem:[%s533 + $0x10] sm:$0xff]
        %v537 = vld [vmem:[%s533 + $0x18] sm:$0x1]
        %v539 = vsel %vm416, %v534, 0
        %v542 = vsel %vm416, %v535, 0
        %v545 = vsel %vm416, %v536, 0
        %v548 = vsel %vm416, %v537, 0
        %v551 = vsel %vm429, %v531, 0
        %v554 = vsel %vm429, %v532, 0
        %556 = vmatprep.subr.mxu0 %v526
        %557 = vmatpush1.msra.mxu0 %v525
        %558 = vmatprep.subr.mxu0 %v528
        %559 = vmatpush1.msra.mxu0 %v527
        %560 = vmatprep.subr.mxu0 %v530
        %561 = vmatpush1.msra.mxu0 %v529
        %562 = vmatprep.subr.mxu0 %v554
        %563 = vmatpush1.msra.mxu0 %v551
        %564 = vmatprep.subr.mxu0 0.0
        %565 = vmatpush1.msra.mxu0 0.0
        %566 = vmatprep.subr.mxu0 0.0
        %567 = vmatpush1.msra.mxu0 0.0
        %568 = vmatprep.subr.mxu0 0.0
        %569 = vmatpush1.msra.mxu0 0.0
        %570 = vmatprep.subr.mxu0 0.0
        %571 = vmatpush1.msra.mxu0 0.0
        %572 = vmatprep.subr.mxu0 0.0
        %573 = vmatpush1.msra.mxu0 0.0
        %574 = vmatprep.subr.mxu0 0.0
        %575 = vmatpush1.msra.mxu0 0.0
        %576 = vmatprep.subr.mxu0 0.0
        %577 = vmatpush1.msra.mxu0 0.0
        %578 = vmatprep.subr.mxu0 0.0
        %579 = vmatpush1.msra.mxu0 0.0
        %580 = vmatprep.subr.mxu0 0.0
        %581 = vmatpush1.msra.mxu0 0.0
        %582 = vmatprep.subr.mxu0 0.0
        %583 = vmatpush1.msra.mxu0 0.0
        %584 = vmatprep.subr.mxu0 0.0
        %585 = vmatpush1.msra.mxu0 0.0
        %586 = vmatprep.subr.mxu0 0.0
        %587 = vmatpush1.msra.mxu0 0.0
        %588 = vmatprep.subr.mxu0 0.0
        %589 = vmatpush1.msra.mxu0 0.0
        %590 = vmatprep.subr.mxu0 0.0
        %591 = vmatpush1.msra.mxu0 0.0
        %592 = vmatprep.subr.mxu0 0.0
        %593 = vmatpush1.msra.mxu0 0.0
        %594 = vmatprep.subr.mxu0 0.0
        %595 = vmatpush1.msra.mxu0 0.0
        %596 = vmatprep.subr.mxu0 0.0
        %597 = vmatpush1.msra.mxu0 0.0
        %598 = vmatprep.subr.mxu0 0.0
        %599 = vmatpush1.msra.mxu0 0.0
        %600 = vmatprep.subr.mxu0 0.0
        %601 = vmatpush1.msra.mxu0 0.0
        %602 = vmatprep.subr.mxu0 0.0
        %603 = vmatpush1.msra.mxu0 0.0
        %604 = vmatprep.subr.mxu0 0.0
        %605 = vmatpush1.msra.mxu0 0.0
        %606 = vmatprep.subr.mxu0 0.0
        %607 = vmatpush1.msra.mxu0 0.0
        %608 = vmatprep.subr.mxu0 0.0
        %609 = vmatpush1.msra.mxu0 0.0
        %610 = vmatprep.subr.mxu0 0.0
        %611 = vmatpush1.msra.mxu0 0.0
        %612 = vmatprep.subr.mxu0 0.0
        %613 = vmatpush1.msra.mxu0 0.0
        %614 = vmatprep.subr.mxu0 0.0
        %615 = vmatpush1.msra.mxu0 0.0
        %616 = vmatprep.subr.mxu0 0.0
        %617 = vmatpush1.msra.mxu0 0.0
        %618 = vmatprep.subr.mxu0 0.0
        %619 = vmatpush1.msra.mxu0 0.0
        %620 = vmatprep.mubr.f32.mxu0 0.0
        %621 = vmatmul.mubr.f32.gmra.mrb[0].mxu0 %v539
        %v622 = vpop.f32.mrb[0].mxu0
        %v623 = vadd.f32 0.0, %v622
        %v624 = vpop.f32.mrb[0].mxu0
        %v625 = vadd.f32 0.0, %v624
        %626 = vmatprep.mubr.f32.mxu0 0.0
        %627 = vmatmul.mubr.f32.gmra.mrb[0].mxu0 %v542
        %v628 = vpop.f32.mrb[0].mxu0
        %v629 = vadd.f32 0.0, %v628
        %v630 = vpop.f32.mrb[0].mxu0
        %v631 = vadd.f32 0.0, %v630
        %632 = vmatprep.mubr.f32.mxu0 0.0
        %633 = vmatmul.mubr.f32.gmra.mrb[0].mxu0 %v545
        %v634 = vpop.f32.mrb[0].mxu0
        %v635 = vadd.f32 0.0, %v634
        %v636 = vpop.f32.mrb[0].mxu0
        %v637 = vadd.f32 0.0, %v636
        %638 = vmatprep.mubr.f32.mxu0 0.0
        %639 = vmatmul.mubr.f32.gmra.mrb[0].mxu0 %v548
        %v640 = vpop.f32.mrb[0].mxu0
        %v641 = vadd.f32 0.0, %v640
        %v642 = vpop.f32.mrb[0].mxu0
        %v643 = vadd.f32 0.0, %v642
        %644 = vdwg.mxu0
        %v645 = vtanh.pop %v623
        %v646 = vtanh.pop %v625
        %v647 = vtanh.pop %v629
        %v648 = vtanh.pop %v631
        %v649 = vtanh.pop %v635
        %v650 = vtanh.pop %v637
        %v651 = vtanh.pop %v641
        %v652 = vtanh.pop %v643
        %s653 = scalar_lea.vmem [#allocation2], 64
        %v654 = vld [vmem:[%s653] sm:$0xff]
        %v655 = vld [vmem:[%s653 + $0x8] sm:$0xff]
        %v656 = vld [vmem:[%s653 + $0x10] sm:$0xff]
        %v657 = vld [vmem:[%s653 + $0x18] sm:$0x1]
        %v659 = vsel %vm416, %v654, 0
        %v662 = vsel %vm416, %v655, 0
        %v665 = vsel %vm416, %v656, 0
        %v668 = vsel %vm416, %v657, 0
        %v671 = vsel %vm429, %v651, 0
        %v674 = vsel %vm429, %v652, 0
        %676 = vmatprep.subr.mxu0 %v646
        %677 = vmatpush1.msra.mxu0 %v645
        %678 = vmatprep.subr.mxu0 %v648
        %679 = vmatpush1.msra.mxu0 %v647
        %680 = vmatprep.subr.mxu0 %v650
        %681 = vmatpush1.msra.mxu0 %v649
        %682 = vmatprep.subr.mxu0 %v674
        %683 = vmatpush1.msra.mxu0 %v671
        %684 = vmatprep.subr.mxu0 0.0
        %685 = vmatpush1.msra.mxu0 0.0
        %686 = vmatprep.subr.mxu0 0.0
        %687 = vmatpush1.msra.mxu0 0.0
        %688 = vmatprep.subr.mxu0 0.0
        %689 = vmatpush1.msra.mxu0 0.0
        %690 = vmatprep.subr.mxu0 0.0
        %691 = vmatpush1.msra.mxu0 0.0
        %692 = vmatprep.subr.mxu0 0.0
        %693 = vmatpush1.msra.mxu0 0.0
        %694 = vmatprep.subr.mxu0 0.0
        %695 = vmatpush1.msra.mxu0 0.0
        %696 = vmatprep.subr.mxu0 0.0
        %697 = vmatpush1.msra.mxu0 0.0
        %698 = vmatprep.subr.mxu0 0.0
        %699 = vmatpush1.msra.mxu0 0.0
        %700 = vmatprep.subr.mxu0 0.0
        %701 = vmatpush1.msra.mxu0 0.0
        %702 = vmatprep.subr.mxu0 0.0
        %703 = vmatpush1.msra.mxu0 0.0
        %704 = vmatprep.subr.mxu0 0.0
        %705 = vmatpush1.msra.mxu0 0.0
        %706 = vmatprep.subr.mxu0 0.0
        %707 = vmatpush1.msra.mxu0 0.0
        %708 = vmatprep.subr.mxu0 0.0
        %709 = vmatpush1.msra.mxu0 0.0
        %710 = vmatprep.subr.mxu0 0.0
        %711 = vmatpush1.msra.mxu0 0.0
        %712 = vmatprep.subr.mxu0 0.0
        %713 = vmatpush1.msra.mxu0 0.0
        %714 = vmatprep.subr.mxu0 0.0
        %715 = vmatpush1.msra.mxu0 0.0
        %716 = vmatprep.subr.mxu0 0.0
        %717 = vmatpush1.msra.mxu0 0.0
        %718 = vmatprep.subr.mxu0 0.0
        %719 = vmatpush1.msra.mxu0 0.0
        %720 = vmatprep.subr.mxu0 0.0
        %721 = vmatpush1.msra.mxu0 0.0
        %722 = vmatprep.subr.mxu0 0.0
        %723 = vmatpush1.msra.mxu0 0.0
        %724 = vmatprep.subr.mxu0 0.0
        %725 = vmatpush1.msra.mxu0 0.0
        %726 = vmatprep.subr.mxu0 0.0
        %727 = vmatpush1.msra.mxu0 0.0
        %728 = vmatprep.subr.mxu0 0.0
        %729 = vmatpush1.msra.mxu0 0.0
        %730 = vmatprep.subr.mxu0 0.0
        %731 = vmatpush1.msra.mxu0 0.0
        %732 = vmatprep.subr.mxu0 0.0
        %733 = vmatpush1.msra.mxu0 0.0
        %734 = vmatprep.subr.mxu0 0.0
        %735 = vmatpush1.msra.mxu0 0.0
        %736 = vmatprep.subr.mxu0 0.0
        %737 = vmatpush1.msra.mxu0 0.0
        %738 = vmatprep.subr.mxu0 0.0
        %739 = vmatpush1.msra.mxu0 0.0
        %740 = vmatprep.mubr.f32.mxu0 0.0
        %741 = vmatmul.mubr.f32.gmra.mrb[0].mxu0 %v659
        %v742 = vpop.f32.mrb[0].mxu0
        %v743 = vadd.f32 0.0, %v742
        %v744 = vpop.f32.mrb[0].mxu0
        %v745 = vadd.f32 0.0, %v744
        %746 = vmatprep.mubr.f32.mxu0 0.0
        %747 = vmatmul.mubr.f32.gmra.mrb[0].mxu0 %v662
        %v748 = vpop.f32.mrb[0].mxu0
        %v749 = vadd.f32 0.0, %v748
        %v750 = vpop.f32.mrb[0].mxu0
        %v751 = vadd.f32 0.0, %v750
        %752 = vmatprep.mubr.f32.mxu0 0.0
        %753 = vmatmul.mubr.f32.gmra.mrb[0].mxu0 %v665
        %v754 = vpop.f32.mrb[0].mxu0
        %v755 = vadd.f32 0.0, %v754
        %v756 = vpop.f32.mrb[0].mxu0
        %v757 = vadd.f32 0.0, %v756
        %758 = vmatprep.mubr.f32.mxu0 0.0
        %759 = vmatmul.mubr.f32.gmra.mrb[0].mxu0 %v668
        %v760 = vpop.f32.mrb[0].mxu0
        %v761 = vadd.f32 0.0, %v760
        %v762 = vpop.f32.mrb[0].mxu0
        %v763 = vadd.f32 0.0, %v762
        %764 = vdwg.mxu0
        %v765 = vtanh.pop %v743
        %v766 = vtanh.pop %v745
        %v767 = vtanh.pop %v749
        %v768 = vtanh.pop %v751
        %v769 = vtanh.pop %v755
        %v770 = vtanh.pop %v757
        %v771 = vtanh.pop %v761
        %v772 = vtanh.pop %v763
        %s773 = scalar_lea.vmem [#allocation2], 96
        %v774 = vld [vmem:[%s773] sm:$0xff]
        %v775 = vld [vmem:[%s773 + $0x8] sm:$0xff]
        %v776 = vld [vmem:[%s773 + $0x10] sm:$0xff]
        %v777 = vld [vmem:[%s773 + $0x18] sm:$0x1]
        %v779 = vsel %vm416, %v774, 0
        %v782 = vsel %vm416, %v775, 0
        %v785 = vsel %vm416, %v776, 0
        %v788 = vsel %vm416, %v777, 0
        %v791 = vsel %vm429, %v771, 0
        %v794 = vsel %vm429, %v772, 0
        %796 = vmatprep.subr.mxu0 %v766
        %797 = vmatpush1.msra.mxu0 %v765
        %798 = vmatprep.subr.mxu0 %v768
        %799 = vmatpush1.msra.mxu0 %v767
        %800 = vmatprep.subr.mxu0 %v770
        %801 = vmatpush1.msra.mxu0 %v769
        %802 = vmatprep.subr.mxu0 %v794
        %803 = vmatpush1.msra.mxu0 %v791
        %804 = vmatprep.subr.mxu0 0.0
        %805 = vmatpush1.msra.mxu0 0.0
        %806 = vmatprep.subr.mxu0 0.0
        %807 = vmatpush1.msra.mxu0 0.0
        %808 = vmatprep.subr.mxu0 0.0
        %809 = vmatpush1.msra.mxu0 0.0
        %810 = vmatprep.subr.mxu0 0.0
        %811 = vmatpush1.msra.mxu0 0.0
        %812 = vmatprep.subr.mxu0 0.0
        %813 = vmatpush1.msra.mxu0 0.0
        %814 = vmatprep.subr.mxu0 0.0
        %815 = vmatpush1.msra.mxu0 0.0
        %816 = vmatprep.subr.mxu0 0.0
        %817 = vmatpush1.msra.mxu0 0.0
        %818 = vmatprep.subr.mxu0 0.0
        %819 = vmatpush1.msra.mxu0 0.0
        %820 = vmatprep.subr.mxu0 0.0
        %821 = vmatpush1.msra.mxu0 0.0
        %822 = vmatprep.subr.mxu0 0.0
        %823 = vmatpush1.msra.mxu0 0.0
        %824 = vmatprep.subr.mxu0 0.0
        %825 = vmatpush1.msra.mxu0 0.0
        %826 = vmatprep.subr.mxu0 0.0
        %827 = vmatpush1.msra.mxu0 0.0
        %828 = vmatprep.subr.mxu0 0.0
        %829 = vmatpush1.msra.mxu0 0.0
        %830 = vmatprep.subr.mxu0 0.0
        %831 = vmatpush1.msra.mxu0 0.0
        %832 = vmatprep.subr.mxu0 0.0
        %833 = vmatpush1.msra.mxu0 0.0
        %834 = vmatprep.subr.mxu0 0.0
        %835 = vmatpush1.msra.mxu0 0.0
        %836 = vmatprep.subr.mxu0 0.0
        %837 = vmatpush1.msra.mxu0 0.0
        %838 = vmatprep.subr.mxu0 0.0
        %839 = vmatpush1.msra.mxu0 0.0
        %840 = vmatprep.subr.mxu0 0.0
        %841 = vmatpush1.msra.mxu0 0.0
        %842 = vmatprep.subr.mxu0 0.0
        %843 = vmatpush1.msra.mxu0 0.0
        %844 = vmatprep.subr.mxu0 0.0
        %845 = vmatpush1.msra.mxu0 0.0
        %846 = vmatprep.subr.mxu0 0.0
        %847 = vmatpush1.msra.mxu0 0.0
        %848 = vmatprep.subr.mxu0 0.0
        %849 = vmatpush1.msra.mxu0 0.0
        %850 = vmatprep.subr.mxu0 0.0
        %851 = vmatpush1.msra.mxu0 0.0
        %852 = vmatprep.subr.mxu0 0.0
        %853 = vmatpush1.msra.mxu0 0.0
        %854 = vmatprep.subr.mxu0 0.0
        %855 = vmatpush1.msra.mxu0 0.0
        %856 = vmatprep.subr.mxu0 0.0
        %857 = vmatpush1.msra.mxu0 0.0
        %858 = vmatprep.subr.mxu0 0.0
        %859 = vmatpush1.msra.mxu0 0.0
        %860 = vmatprep.mubr.f32.mxu0 0.0
        %861 = vmatmul.mubr.f32.gmra.mrb[0].mxu0 %v779
        %v862 = vpop.f32.mrb[0].mxu0
        %v863 = vadd.f32 0.0, %v862
        %v864 = vpop.f32.mrb[0].mxu0
        %v865 = vadd.f32 0.0, %v864
        %866 = vmatprep.mubr.f32.mxu0 0.0
        %867 = vmatmul.mubr.f32.gmra.mrb[0].mxu0 %v782
        %v868 = vpop.f32.mrb[0].mxu0
        %v869 = vadd.f32 0.0, %v868
        %v870 = vpop.f32.mrb[0].mxu0
        %v871 = vadd.f32 0.0, %v870
        %872 = vmatprep.mubr.f32.mxu0 0.0
        %873 = vmatmul.mubr.f32.gmra.mrb[0].mxu0 %v785
        %v874 = vpop.f32.mrb[0].mxu0
        %v875 = vadd.f32 0.0, %v874
        %v876 = vpop.f32.mrb[0].mxu0
        %v877 = vadd.f32 0.0, %v876
        %878 = vmatprep.mubr.f32.mxu0 0.0
        %879 = vmatmul.mubr.f32.gmra.mrb[0].mxu0 %v788
        %v880 = vpop.f32.mrb[0].mxu0
        %v881 = vadd.f32 0.0, %v880
        %v882 = vpop.f32.mrb[0].mxu0
        %v883 = vadd.f32 0.0, %v882
        %884 = vdwg.mxu0
        %v885 = vtanh.pop %v863
        %v886 = vtanh.pop %v865
        %v887 = vtanh.pop %v869
        %v888 = vtanh.pop %v871
        %v889 = vtanh.pop %v875
        %v890 = vtanh.pop %v877
        %v891 = vtanh.pop %v881
        %v892 = vtanh.pop %v883
        %s893 = scalar_lea.vmem [#allocation2], 128
        %v894 = vld [vmem:[%s893] sm:$0xff]
        %v895 = vld [vmem:[%s893 + $0x8] sm:$0xff]
        %v896 = vld [vmem:[%s893 + $0x10] sm:$0xff]
        %v897 = vld [vmem:[%s893 + $0x18] sm:$0x1]
        %v899 = vsel %vm416, %v894, 0
        %v902 = vsel %vm416, %v895, 0
        %v905 = vsel %vm416, %v896, 0
        %v908 = vsel %vm416, %v897, 0
        %v911 = vsel %vm429, %v891, 0
        %v914 = vsel %vm429, %v892, 0
        %916 = vmatprep.subr.mxu0 %v886
        %917 = vmatpush1.msra.mxu0 %v885
        %918 = vmatprep.subr.mxu0 %v888
        %919 = vmatpush1.msra.mxu0 %v887
        %920 = vmatprep.subr.mxu0 %v890
        %921 = vmatpush1.msra.mxu0 %v889
        %922 = vmatprep.subr.mxu0 %v914
        %923 = vmatpush1.msra.mxu0 %v911
        %924 = vmatprep.subr.mxu0 0.0
        %925 = vmatpush1.msra.mxu0 0.0
        %926 = vmatprep.subr.mxu0 0.0
        %927 = vmatpush1.msra.mxu0 0.0
        %928 = vmatprep.subr.mxu0 0.0
        %929 = vmatpush1.msra.mxu0 0.0
        %930 = vmatprep.subr.mxu0 0.0
        %931 = vmatpush1.msra.mxu0 0.0
        %932 = vmatprep.subr.mxu0 0.0
        %933 = vmatpush1.msra.mxu0 0.0
        %934 = vmatprep.subr.mxu0 0.0
        %935 = vmatpush1.msra.mxu0 0.0
        %936 = vmatprep.subr.mxu0 0.0
        %937 = vmatpush1.msra.mxu0 0.0
        %938 = vmatprep.subr.mxu0 0.0
        %939 = vmatpush1.msra.mxu0 0.0
        %940 = vmatprep.subr.mxu0 0.0
        %941 = vmatpush1.msra.mxu0 0.0
        %942 = vmatprep.subr.mxu0 0.0
        %943 = vmatpush1.msra.mxu0 0.0
        %944 = vmatprep.subr.mxu0 0.0
        %945 = vmatpush1.msra.mxu0 0.0
        %946 = vmatprep.subr.mxu0 0.0
        %947 = vmatpush1.msra.mxu0 0.0
        %948 = vmatprep.subr.mxu0 0.0
        %949 = vmatpush1.msra.mxu0 0.0
        %950 = vmatprep.subr.mxu0 0.0
        %951 = vmatpush1.msra.mxu0 0.0
        %952 = vmatprep.subr.mxu0 0.0
        %953 = vmatpush1.msra.mxu0 0.0
        %954 = vmatprep.subr.mxu0 0.0
        %955 = vmatpush1.msra.mxu0 0.0
        %956 = vmatprep.subr.mxu0 0.0
        %957 = vmatpush1.msra.mxu0 0.0
        %958 = vmatprep.subr.mxu0 0.0
        %959 = vmatpush1.msra.mxu0 0.0
        %960 = vmatprep.subr.mxu0 0.0
        %961 = vmatpush1.msra.mxu0 0.0
        %962 = vmatprep.subr.mxu0 0.0
        %963 = vmatpush1.msra.mxu0 0.0
        %964 = vmatprep.subr.mxu0 0.0
        %965 = vmatpush1.msra.mxu0 0.0
        %966 = vmatprep.subr.mxu0 0.0
        %967 = vmatpush1.msra.mxu0 0.0
        %968 = vmatprep.subr.mxu0 0.0
        %969 = vmatpush1.msra.mxu0 0.0
        %970 = vmatprep.subr.mxu0 0.0
        %971 = vmatpush1.msra.mxu0 0.0
        %972 = vmatprep.subr.mxu0 0.0
        %973 = vmatpush1.msra.mxu0 0.0
        %974 = vmatprep.subr.mxu0 0.0
        %975 = vmatpush1.msra.mxu0 0.0
        %976 = vmatprep.subr.mxu0 0.0
        %977 = vmatpush1.msra.mxu0 0.0
        %978 = vmatprep.subr.mxu0 0.0
        %979 = vmatpush1.msra.mxu0 0.0
        %980 = vmatprep.mubr.f32.mxu0 0.0
        %981 = vmatmul.mubr.f32.gmra.mrb[0].mxu0 %v899
        %v982 = vpop.f32.mrb[0].mxu0
        %v983 = vadd.f32 0.0, %v982
        %v984 = vpop.f32.mrb[0].mxu0
        %v985 = vadd.f32 0.0, %v984
        %986 = vmatprep.mubr.f32.mxu0 0.0
        %987 = vmatmul.mubr.f32.gmra.mrb[0].mxu0 %v902
        %v988 = vpop.f32.mrb[0].mxu0
        %v989 = vadd.f32 0.0, %v988
        %v990 = vpop.f32.mrb[0].mxu0
        %v991 = vadd.f32 0.0, %v990
        %992 = vmatprep.mubr.f32.mxu0 0.0
        %993 = vmatmul.mubr.f32.gmra.mrb[0].mxu0 %v905
        %v994 = vpop.f32.mrb[0].mxu0
        %v995 = vadd.f32 0.0, %v994
        %v996 = vpop.f32.mrb[0].mxu0
        %v997 = vadd.f32 0.0, %v996
        %998 = vmatprep.mubr.f32.mxu0 0.0
        %999 = vmatmul.mubr.f32.gmra.mrb[0].mxu0 %v908
        %v1000 = vpop.f32.mrb[0].mxu0
        %v1001 = vadd.f32 0.0, %v1000
        %v1002 = vpop.f32.mrb[0].mxu0
        %v1003 = vadd.f32 0.0, %v1002
        %1004 = vdwg.mxu0
        %v1005 = vtanh.pop %v983
        %v1006 = vtanh.pop %v985
        %v1007 = vtanh.pop %v989
        %v1008 = vtanh.pop %v991
        %v1009 = vtanh.pop %v995
        %v1010 = vtanh.pop %v997
        %v1011 = vtanh.pop %v1001
        %v1012 = vtanh.pop %v1003
        %s1013 = scalar_lea.vmem [#allocation2], 160
        %v1014 = vld [vmem:[%s1013] sm:$0xff]
        %v1015 = vld [vmem:[%s1013 + $0x8] sm:$0xff]
        %v1016 = vld [vmem:[%s1013 + $0x10] sm:$0xff]
        %v1017 = vld [vmem:[%s1013 + $0x18] sm:$0x1]
        %v1019 = vsel %vm416, %v1014, 0
        %v1022 = vsel %vm416, %v1015, 0
        %v1025 = vsel %vm416, %v1016, 0
        %v1028 = vsel %vm416, %v1017, 0
        %v1031 = vsel %vm429, %v1011, 0
        %v1034 = vsel %vm429, %v1012, 0
        %1036 = vmatprep.subr.mxu0 %v1006
        %1037 = vmatpush1.msra.mxu0 %v1005
        %1038 = vmatprep.subr.mxu0 %v1008
        %1039 = vmatpush1.msra.mxu0 %v1007
        %1040 = vmatprep.subr.mxu0 %v1010
        %1041 = vmatpush1.msra.mxu0 %v1009
        %1042 = vmatprep.subr.mxu0 %v1034
        %1043 = vmatpush1.msra.mxu0 %v1031
        %1044 = vmatprep.subr.mxu0 0.0
        %1045 = vmatpush1.msra.mxu0 0.0
        %1046 = vmatprep.subr.mxu0 0.0
        %1047 = vmatpush1.msra.mxu0 0.0
        %1048 = vmatprep.subr.mxu0 0.0
        %1049 = vmatpush1.msra.mxu0 0.0
        %1050 = vmatprep.subr.mxu0 0.0
        %1051 = vmatpush1.msra.mxu0 0.0
        %1052 = vmatprep.subr.mxu0 0.0
        %1053 = vmatpush1.msra.mxu0 0.0
        %1054 = vmatprep.subr.mxu0 0.0
        %1055 = vmatpush1.msra.mxu0 0.0
        %1056 = vmatprep.subr.mxu0 0.0
        %1057 = vmatpush1.msra.mxu0 0.0
        %1058 = vmatprep.subr.mxu0 0.0
        %1059 = vmatpush1.msra.mxu0 0.0
        %1060 = vmatprep.subr.mxu0 0.0
        %1061 = vmatpush1.msra.mxu0 0.0
        %1062 = vmatprep.subr.mxu0 0.0
        %1063 = vmatpush1.msra.mxu0 0.0
        %1064 = vmatprep.subr.mxu0 0.0
        %1065 = vmatpush1.msra.mxu0 0.0
        %1066 = vmatprep.subr.mxu0 0.0
        %1067 = vmatpush1.msra.mxu0 0.0
        %1068 = vmatprep.subr.mxu0 0.0
        %1069 = vmatpush1.msra.mxu0 0.0
        %1070 = vmatprep.subr.mxu0 0.0
        %1071 = vmatpush1.msra.mxu0 0.0
        %1072 = vmatprep.subr.mxu0 0.0
        %1073 = vmatpush1.msra.mxu0 0.0
        %1074 = vmatprep.subr.mxu0 0.0
        %1075 = vmatpush1.msra.mxu0 0.0
        %1076 = vmatprep.subr.mxu0 0.0
        %1077 = vmatpush1.msra.mxu0 0.0
        %1078 = vmatprep.subr.mxu0 0.0
        %1079 = vmatpush1.msra.mxu0 0.0
        %1080 = vmatprep.subr.mxu0 0.0
        %1081 = vmatpush1.msra.mxu0 0.0
        %1082 = vmatprep.subr.mxu0 0.0
        %1083 = vmatpush1.msra.mxu0 0.0
        %1084 = vmatprep.subr.mxu0 0.0
        %1085 = vmatpush1.msra.mxu0 0.0
        %1086 = vmatprep.subr.mxu0 0.0
        %1087 = vmatpush1.msra.mxu0 0.0
        %1088 = vmatprep.subr.mxu0 0.0
        %1089 = vmatpush1.msra.mxu0 0.0
        %1090 = vmatprep.subr.mxu0 0.0
        %1091 = vmatpush1.msra.mxu0 0.0
        %1092 = vmatprep.subr.mxu0 0.0
        %1093 = vmatpush1.msra.mxu0 0.0
        %1094 = vmatprep.subr.mxu0 0.0
        %1095 = vmatpush1.msra.mxu0 0.0
        %1096 = vmatprep.subr.mxu0 0.0
        %1097 = vmatpush1.msra.mxu0 0.0
        %1098 = vmatprep.subr.mxu0 0.0
        %1099 = vmatpush1.msra.mxu0 0.0
        %1100 = vmatprep.mubr.f32.mxu0 0.0
        %1101 = vmatmul.mubr.f32.gmra.mrb[0].mxu0 %v1019
        %v1102 = vpop.f32.mrb[0].mxu0
        %v1103 = vadd.f32 0.0, %v1102
        %v1104 = vpop.f32.mrb[0].mxu0
        %v1105 = vadd.f32 0.0, %v1104
        %1106 = vmatprep.mubr.f32.mxu0 0.0
        %1107 = vmatmul.mubr.f32.gmra.mrb[0].mxu0 %v1022
        %v1108 = vpop.f32.mrb[0].mxu0
        %v1109 = vadd.f32 0.0, %v1108
        %v1110 = vpop.f32.mrb[0].mxu0
        %v1111 = vadd.f32 0.0, %v1110
        %1112 = vmatprep.mubr.f32.mxu0 0.0
        %1113 = vmatmul.mubr.f32.gmra.mrb[0].mxu0 %v1025
        %v1114 = vpop.f32.mrb[0].mxu0
        %v1115 = vadd.f32 0.0, %v1114
        %v1116 = vpop.f32.mrb[0].mxu0
        %v1117 = vadd.f32 0.0, %v1116
        %1118 = vmatprep.mubr.f32.mxu0 0.0
        %1119 = vmatmul.mubr.f32.gmra.mrb[0].mxu0 %v1028
        %v1120 = vpop.f32.mrb[0].mxu0
        %v1121 = vadd.f32 0.0, %v1120
        %v1122 = vpop.f32.mrb[0].mxu0
        %v1123 = vadd.f32 0.0, %v1122
        %1124 = vdwg.mxu0
        %v1125 = vtanh.pop %v1103
        %v1126 = vtanh.pop %v1105
        %v1127 = vtanh.pop %v1109
        %v1128 = vtanh.pop %v1111
        %v1129 = vtanh.pop %v1115
        %v1130 = vtanh.pop %v1117
        %v1131 = vtanh.pop %v1121
        %v1132 = vtanh.pop %v1123
        %v1133 = vld [vmem:[%s3] sm:$0x7]
        %v1135 = vsel %vm416, %v1133, 0
        %v1138 = vsel %vm429, %v1131, 0
        %v1141 = vsel %vm429, %v1132, 0
        %1143 = vmatprep.subr.mxu0 %v1126
        %1144 = vmatpush1.msra.mxu0 %v1125
        %1145 = vmatprep.subr.mxu0 %v1128
        %1146 = vmatpush1.msra.mxu0 %v1127
        %1147 = vmatprep.subr.mxu0 %v1130
        %1148 = vmatpush1.msra.mxu0 %v1129
        %1149 = vmatprep.subr.mxu0 %v1141
        %1150 = vmatpush1.msra.mxu0 %v1138
        %1151 = vmatprep.subr.mxu0 0.0
        %1152 = vmatpush1.msra.mxu0 0.0
        %1153 = vmatprep.subr.mxu0 0.0
        %1154 = vmatpush1.msra.mxu0 0.0
        %1155 = vmatprep.subr.mxu0 0.0
        %1156 = vmatpush1.msra.mxu0 0.0
        %1157 = vmatprep.subr.mxu0 0.0
        %1158 = vmatpush1.msra.mxu0 0.0
        %1159 = vmatprep.subr.mxu0 0.0
        %1160 = vmatpush1.msra.mxu0 0.0
        %1161 = vmatprep.subr.mxu0 0.0
        %1162 = vmatpush1.msra.mxu0 0.0
        %1163 = vmatprep.subr.mxu0 0.0
        %1164 = vmatpush1.msra.mxu0 0.0
        %1165 = vmatprep.subr.mxu0 0.0
        %1166 = vmatpush1.msra.mxu0 0.0
        %1167 = vmatprep.subr.mxu0 0.0
        %1168 = vmatpush1.msra.mxu0 0.0
        %1169 = vmatprep.subr.mxu0 0.0
        %1170 = vmatpush1.msra.mxu0 0.0
        %1171 = vmatprep.subr.mxu0 0.0
        %1172 = vmatpush1.msra.mxu0 0.0
        %1173 = vmatprep.subr.mxu0 0.0
        %1174 = vmatpush1.msra.mxu0 0.0
        %1175 = vmatprep.subr.mxu0 0.0
        %1176 = vmatpush1.msra.mxu0 0.0
        %1177 = vmatprep.subr.mxu0 0.0
        %1178 = vmatpush1.msra.mxu0 0.0
        %1179 = vmatprep.subr.mxu0 0.0
        %1180 = vmatpush1.msra.mxu0 0.0
        %1181 = vmatprep.subr.mxu0 0.0
        %1182 = vmatpush1.msra.mxu0 0.0
        %1183 = vmatprep.subr.mxu0 0.0
        %1184 = vmatpush1.msra.mxu0 0.0
        %1185 = vmatprep.subr.mxu0 0.0
        %1186 = vmatpush1.msra.mxu0 0.0
        %1187 = vmatprep.subr.mxu0 0.0
        %1188 = vmatpush1.msra.mxu0 0.0
        %1189 = vmatprep.subr.mxu0 0.0
        %1190 = vmatpush1.msra.mxu0 0.0
        %1191 = vmatprep.subr.mxu0 0.0
        %1192 = vmatpush1.msra.mxu0 0.0
        %1193 = vmatprep.subr.mxu0 0.0
        %1194 = vmatpush1.msra.mxu0 0.0
        %1195 = vmatprep.subr.mxu0 0.0
        %1196 = vmatpush1.msra.mxu0 0.0
        %1197 = vmatprep.subr.mxu0 0.0
        %1198 = vmatpush1.msra.mxu0 0.0
        %1199 = vmatprep.subr.mxu0 0.0
        %1200 = vmatpush1.msra.mxu0 0.0
        %1201 = vmatprep.subr.mxu0 0.0
        %1202 = vmatpush1.msra.mxu0 0.0
        %1203 = vmatprep.subr.mxu0 0.0
        %1204 = vmatpush1.msra.mxu0 0.0
        %1205 = vmatprep.subr.mxu0 0.0
        %1206 = vmatpush1.msra.mxu0 0.0
        %1207 = vmatprep.mubr.f32.mxu0 0.0
        %1208 = vmatmul.mubr.f32.gmra.mrb[0].mxu0 %v1135
        %v1209 = vpop.f32.mrb[0].mxu0
        %v1210 = vadd.f32 0.0, %v1209
        %v1211 = vpop.f32.mrb[0].mxu0
        %v1212 = vadd.f32 0.0, %v1211
        %1213 = vdwg.mxu0
        %v1214 = vxor.u32 %v1210, 2147483648
        %v1215 = vxor.u32 %v1212, 2147483648
        %v1216 = vmul.f32 %v1214, 1.442695
        %v1217 = vpow.pop %v1216
        %v1218 = vmul.f32 %v1215, 1.442695
        %v1219 = vpow.pop %v1218
        %v1220 = vadd.f32 %v1217, 1.0
        %v1221 = vadd.f32 %v1219, 1.0
        %v1222 = vrcp.pop %v1220
        %v1223 = vmul.f32 1.0, %v1222
        %v1224 = vrcp.pop %v1221
        %v1225 = vmul.f32 1.0, %v1224
        %v1228 = vcombine.low %v1223, %v1225
        %1230 = vst [vmem:[%s250] sm:$0x77] %v1228
        %s1231 = smul.u32 2, %s21
        %p1232 = scmp.lt.s32.totalorder %s20, 1
        %s1233 = scalar_select %p1232, %s20, 1
        %p1234 = scmp.lt.s32.totalorder %s1231, 1
        %s1235 = scalar_select %p1234, %s1231, 1
        %s1236 = smul.addr %s1233, 2
        %s1237 = sadd.s32 %s1235, %s1236
        %s1238 = smul.addr %s1237, 4
        %s1239 = scalar_lea.vmem %s4, %s1238
        // Predicated region
        $region41: #{_simplenet_call.1} parent=35 // pred_check
          %p1240 = pneg %p139
        $region42: #{_simplenet_call.1} parent=35 // pred_check_branch
          %1242 = sbr.rel (%p1240) target = $region44
        $region43: #{_simplenet_call.1} parent=35 // pred_region
          %s1243 = smul.u32 2, %s21
        $region44: #{_simplenet_call.1} parent=35 // pred_fallthru
          _
      $region36: #{_simplenet_call.1} parent=5 // pred_fallthru
        _
      %p1244 = scmp.le.s32.totalorder 2, %s11
      // Predicated region
      $region45: #{_simplenet_call.1} parent=5 // pred_check
        %p1245 = pneg %p1244
      $region46: #{_simplenet_call.1} parent=5 // pred_check_branch
        %1247 = sbr.rel (%p1245) target = $region48
      $region47: #{_simplenet_call.1} parent=5 // pred_region
        %s1248 = ssub.s32 %s11, 2
        // Predicated region
        $region49: #{_simplenet_call.1} parent=47 // pred_check
          %p1249 = pneg %p145
        $region50: #{_simplenet_call.1} parent=47 // pred_check_branch
          %1251 = sbr.rel (%p1249) target = $region52
        $region51: #{_simplenet_call.1} parent=47 // pred_region
          %s1252 = smul.u32 2, %s23
          %p1253 = scmp.lt.s32.totalorder %s22, 1
          %s1254 = scalar_select %p1253, %s22, 1
          %p1255 = scmp.lt.s32.totalorder %s1252, 1
          %s1256 = scalar_select %p1255, %s1252, 1
          %s1257 = smul.addr %s1254, 2
          %s1258 = sadd.s32 %s1256, %s1257
          %s1259 = smul.addr %s1258, 4
          %s1260 = scalar_lea.vmem %s4, %s1259
        $region52: #{_simplenet_call.1} parent=47 // pred_fallthru
          _
      $region48: #{_simplenet_call.1} parent=5 // pred_fallthru
        _
    $region6: #{_simplenet_call.1} parent=1 // loop_footer
      %s15 = sadd.s32 1, %s11
    $region7: #{_simplenet_call.1} parent=1 // loop_footer_branch
      %10 = sbr.rel target = $region3
    $region8: #{_simplenet_call.1} parent=1 // loop_exit
      _
    %1261 = vsyncpa [#allocation3], 1
    %s1262 = scalar_lea.sflag [#allocation3], 1
    %1263 = vsyncpa %s1262, 1

</llo_original>
